<compile_context>
chip_gen: v6e
topology: v6e:2x2x1
jax: 0.10.0
libtpu: 0.0.40
codegen_flags: <defaults>
</compile_context>

<pallas_src>
import jax
import jax.numpy as jnp
from jax import lax
from jax.experimental import pallas as pl
from jax.experimental.pallas import tpu as pltpu

DELTA = 1e-3  # DND kernel smoothing constant


# ---------------------------------------------------------------------------
# Fused kernel: embedding MLP -> keys -> all-action DND lookup -> Q (Bp, A)
# ---------------------------------------------------------------------------
def nec_kernel(x_ref, w1_ref, b1_ref, w2_ref, b2_ref, memt_ref, vflat_ref, q_ref):
    A = q_ref.shape[1]
    AM = vflat_ref.shape[1]
    M = AM // A

    # --- embedding MLP (MXU) ---------------------------------------------
    x = x_ref[...]                                                  # (Bp, Din)
    h = jnp.dot(x, w1_ref[...], preferred_element_type=jnp.float32) + b1_ref[...]
    h = jnp.maximum(h, 0.0)                                         # ReLU
    keys = (
        jnp.dot(h, w2_ref[...], preferred_element_type=jnp.float32) + b2_ref[...]
    )                                                               # (Bp, K)

    # --- inverse-distance kernel against ALL actions' memory at once ------
    memt = memt_ref[...]                                            # (K, A*M)
    s = jnp.dot(keys, memt, preferred_element_type=jnp.float32)     # (Bp, A*M)
    k2 = jnp.sum(keys * keys, axis=-1, keepdims=True)               # (Bp, 1)
    m2 = jnp.sum(memt * memt, axis=0, keepdims=True)                # (1, A*M)
    d2 = jnp.maximum(k2 + m2 - 2.0 * s, 0.0)                        # clamp f32 cancellation
    kern = pl.reciprocal(d2 + DELTA, approx=True)                   # (Bp, A*M), EUP

    # --- per-action segment sums via block-diagonal selector (MXU) --------
    row = lax.broadcasted_iota(jnp.int32, (AM, A), 0)
    col = lax.broadcasted_iota(jnp.int32, (AM, A), 1)
    seg = jnp.logical_and(row >= col * M, row < (col + 1) * M).astype(jnp.float32)

    denom = jnp.dot(kern, seg, preferred_element_type=jnp.float32)               # (Bp, A)
    numer = jnp.dot(kern * vflat_ref[...], seg, preferred_element_type=jnp.float32)
    q_ref[...] = numer * pl.reciprocal(denom, approx=True)          # (Bp, A)


# ---------------------------------------------------------------------------
# Wrapper
# ---------------------------------------------------------------------------
@jax.jit
def nec_forward(obs, params):
    B = obs.shape[0]
    x = obs.reshape(B, -1).astype(jnp.float32)                      # NCHW -> (B, Din)
    Din = x.shape[1]

    # pad batch to a multiple of 8 (f32 sublane count) for full-width vregs
    Bp = ((B + 7) // 8) * 8
    x_pad = jnp.pad(x, ((0, Bp - B), (0, 0)))

    mem = params["mem_keys"]                                        # (A, M, K)
    A, M, K = mem.shape
    HID = params["w1"].shape[1]
    memt = jnp.transpose(mem, (2, 0, 1)).reshape(K, A * M)          # (K, A*M)
    vflat = params["mem_vals"].reshape(1, A * M)                    # (1, A*M)

    flops = 2 * Bp * (Din * HID + HID * K + K * A * M + 2 * A * M * A)
    transcendentals = Bp * (A * M + A)
    bytes_accessed = 4 * (
        Bp * Din + Din * HID + HID + HID * K + K + K * A * M + A * M + Bp * A
    )

    vmem_spec = pl.BlockSpec(memory_space=pltpu.MemorySpace.VMEM)
    q_pad = pl.pallas_call(
        nec_kernel,
        out_shape=jax.ShapeDtypeStruct((Bp, A), jnp.float32),
        in_specs=[vmem_spec] * 7,
        out_specs=vmem_spec,
        cost_estimate=pl.CostEstimate(
            flops=flops,
            transcendentals=transcendentals,
            bytes_accessed=bytes_accessed,
        ),
    )(
        x_pad,
        params["w1"],
        params["b1"],
        params["w2"],
        params["b2"],
        memt,
        vflat,
    )
    return q_pad[:B]                                                # (B, A)


# pure-JAX reference for a correctness check (mirrors the PyTorch semantics)
def nec_reference(obs, params):
    B = obs.shape[0]
    x = obs.reshape(B, -1).astype(jnp.float32)
    h = jnp.maximum(x @ params["w1"] + params["b1"], 0.0)
    keys = h @ params["w2"] + params["b2"]
    mem = params["mem_keys"]                                        # (A, M, K)
    vals = params["mem_vals"][:, 0, :]                              # (A, M)
    d2 = (
        jnp.sum(keys * keys, -1)[None, :, None]
        + jnp.sum(mem * mem, -1)[:, None, :]
        - 2.0 * jnp.einsum("bk,amk->abm", keys, mem)
    )                                                               # (A, B, M)
    kern = 1.0 / (d2 + DELTA)
    w = kern / jnp.sum(kern, -1, keepdims=True)
    q = jnp.einsum("abm,am->ab", w, vals)                           # (A, B)
    return q.T                                                      # (B, A)


if __name__ == "__main__":
    # small, deterministic problem sizes
    B, C, H, W = 2, 4, 16, 16          # observations (NCHW)
    Din = C * H * W                    # 1024
    HID = 64                           # embedding hidden width
    K = 32                             # key / embedding dim
    A = 4                              # n_actions
    M = 64                             # DND memory size per action

    root = jax.random.PRNGKey(0)
    k_obs, k_w1, k_b1, k_w2, k_b2, k_mk, k_mv = jax.random.split(root, 7)

    obs = jax.random.normal(k_obs, (B, C, H, W), dtype=jnp.float32)

    params = {
        "w1": jax.random.normal(k_w1, (Din, HID), dtype=jnp.float32) * 0.05,
        "b1": jax.random.normal(k_b1, (1, HID), dtype=jnp.float32) * 0.01,
        "w2": jax.random.normal(k_w2, (HID, K), dtype=jnp.float32) * 0.1,
        "b2": jax.random.normal(k_b2, (1, K), dtype=jnp.float32) * 0.01,
        "mem_keys": jax.random.normal(k_mk, (A, M, K), dtype=jnp.float32),
        "mem_vals": jax.random.normal(k_mv, (A, 1, M), dtype=jnp.float32),
    }

    qs = jax.block_until_ready(nec_forward(obs, params))
    ref = jax.block_until_ready(nec_reference(obs, params))

    assert qs.shape == (B, A), qs.shape
    # tolerance relaxed slightly vs f64-exact since the kernel uses the EUP
    # approximate reciprocal (pl.reciprocal(approx=True)) for the DND kernel.
    assert jnp.allclose(qs, ref, atol=5e-3, rtol=5e-3), (qs, ref)
    print("KERNEL_OK")
</pallas_src>

<mosaic_0001>
module attributes {stable_mosaic.version = 11 : i64} {
  func.func @nec_kernel(%arg0: memref<8x1024xf32, #tpu.memory_space<vmem>>, %arg1: memref<1024x64xf32, #tpu.memory_space<vmem>>, %arg2: memref<1x64xf32, #tpu.memory_space<vmem>>, %arg3: memref<64x32xf32, #tpu.memory_space<vmem>>, %arg4: memref<1x32xf32, #tpu.memory_space<vmem>>, %arg5: memref<32x256xf32, #tpu.memory_space<vmem>>, %arg6: memref<1x256xf32, #tpu.memory_space<vmem>>, %arg7: memref<8x4xf32, #tpu.memory_space<vmem>>) attributes {dimension_semantics = [], scalar_prefetch = 0 : i64, scratch_operands = 0 : i64, tpu.core_type = #tpu.core_type<tc>} {
    %c0 = arith.constant 0 : index
    %c0_0 = arith.constant 0 : index
    %0 = vector.load %arg0[%c0, %c0_0] : memref<8x1024xf32, #tpu.memory_space<vmem>>, vector<8x1024xf32>
    %c0_1 = arith.constant 0 : index
    %c0_2 = arith.constant 0 : index
    %1 = vector.load %arg1[%c0_1, %c0_2] : memref<1024x64xf32, #tpu.memory_space<vmem>>, vector<1024x64xf32>
    %cst = arith.constant dense<0.000000e+00> : vector<8x64xf32>
    %2 = tpu.matmul %0, %1, %cst {dimension_numbers = #tpu.dot_dimension_numbers<[1], [0], [0], [1], [0, 0, 1, 1], [], []>} : vector<8x1024xf32>, vector<1024x64xf32>, vector<8x64xf32> -> vector<8x64xf32>
    %c0_3 = arith.constant 0 : index
    %c0_4 = arith.constant 0 : index
    %3 = vector.load %arg2[%c0_3, %c0_4] : memref<1x64xf32, #tpu.memory_space<vmem>>, vector<1x64xf32>
    %4 = vector.broadcast %3 : vector<1x64xf32> to vector<8x64xf32>
    %5 = arith.addf %2, %4 : vector<8x64xf32>
    %cst_5 = arith.constant 0.000000e+00 : f32
    %6 = vector.broadcast %cst_5 : f32 to vector<8x64xf32>
    %7 = arith.maximumf %5, %6 : vector<8x64xf32>
    %c0_6 = arith.constant 0 : index
    %c0_7 = arith.constant 0 : index
    %8 = vector.load %arg3[%c0_6, %c0_7] : memref<64x32xf32, #tpu.memory_space<vmem>>, vector<64x32xf32>
    %cst_8 = arith.constant dense<0.000000e+00> : vector<8x32xf32>
    %9 = tpu.matmul %7, %8, %cst_8 {dimension_numbers = #tpu.dot_dimension_numbers<[1], [0], [0], [1], [0, 0, 1, 1], [], []>} : vector<8x64xf32>, vector<64x32xf32>, vector<8x32xf32> -> vector<8x32xf32>
    %c0_9 = arith.constant 0 : index
    %c0_10 = arith.constant 0 : index
    %10 = vector.load %arg4[%c0_9, %c0_10] : memref<1x32xf32, #tpu.memory_space<vmem>>, vector<1x32xf32>
    %11 = vector.broadcast %10 : vector<1x32xf32> to vector<8x32xf32>
    %12 = arith.addf %9, %11 : vector<8x32xf32>
    %c0_11 = arith.constant 0 : index
    %c0_12 = arith.constant 0 : index
    %13 = vector.load %arg5[%c0_11, %c0_12] : memref<32x256xf32, #tpu.memory_space<vmem>>, vector<32x256xf32>
    %cst_13 = arith.constant dense<0.000000e+00> : vector<8x256xf32>
    %14 = tpu.matmul %12, %13, %cst_13 {dimension_numbers = #tpu.dot_dimension_numbers<[1], [0], [0], [1], [0, 0, 1, 1], [], []>} : vector<8x32xf32>, vector<32x256xf32>, vector<8x256xf32> -> vector<8x256xf32>
    %15 = arith.mulf %12, %12 : vector<8x32xf32>
    %cst_14 = arith.constant dense<0.000000e+00> : vector<8xf32>
    %16 = vector.multi_reduction <add>, %15, %cst_14 [1] : vector<8x32xf32> to vector<8xf32>
    %17 = vector.shape_cast %16 : vector<8xf32> to vector<8x1xf32>
    %18 = arith.mulf %13, %13 : vector<32x256xf32>
    %cst_15 = arith.constant dense<0.000000e+00> : vector<256xf32>
    %19 = vector.multi_reduction <add>, %18, %cst_15 [0] : vector<32x256xf32> to vector<256xf32>
    %20 = vector.shape_cast %19 : vector<256xf32> to vector<1x256xf32>
    %21 = vector.broadcast %17 : vector<8x1xf32> to vector<8x256xf32>
    %22 = vector.broadcast %20 : vector<1x256xf32> to vector<8x256xf32>
    %23 = arith.addf %21, %22 : vector<8x256xf32>
    %cst_16 = arith.constant 2.000000e+00 : f32
    %24 = vector.broadcast %cst_16 : f32 to vector<8x256xf32>
    %25 = arith.mulf %24, %14 : vector<8x256xf32>
    %26 = arith.subf %23, %25 : vector<8x256xf32>
    %cst_17 = arith.constant 0.000000e+00 : f32
    %27 = vector.broadcast %cst_17 : f32 to vector<8x256xf32>
    %28 = arith.maximumf %26, %27 : vector<8x256xf32>
    %cst_18 = arith.constant 1.000000e-03 : f32
    %29 = vector.broadcast %cst_18 : f32 to vector<8x256xf32>
    %30 = arith.addf %28, %29 : vector<8x256xf32>
    %31 = tpu.reciprocal %30 {approx = true} : vector<8x256xf32> -> vector<8x256xf32>
    %32 = tpu.iota {dimensions = array<i32: 0>} : vector<256x4xi32>
    %33 = tpu.iota {dimensions = array<i32: 1>} : vector<256x4xi32>
    %c64_i32 = arith.constant 64 : i32
    %34 = vector.broadcast %c64_i32 : i32 to vector<256x4xi32>
    %35 = arith.muli %33, %34 : vector<256x4xi32>
    %36 = arith.cmpi sge, %32, %35 : vector<256x4xi32>
    %c1_i32 = arith.constant 1 : i32
    %37 = vector.broadcast %c1_i32 : i32 to vector<256x4xi32>
    %38 = arith.addi %33, %37 : vector<256x4xi32>
    %c64_i32_19 = arith.constant 64 : i32
    %39 = vector.broadcast %c64_i32_19 : i32 to vector<256x4xi32>
    %40 = arith.muli %38, %39 : vector<256x4xi32>
    %41 = arith.cmpi slt, %32, %40 : vector<256x4xi32>
    %42 = arith.andi %36, %41 : vector<256x4xi1>
    %43 = arith.extui %42 : vector<256x4xi1> to vector<256x4xi32>
    %44 = arith.sitofp %43 : vector<256x4xi32> to vector<256x4xf32>
    %cst_20 = arith.constant dense<0.000000e+00> : vector<8x4xf32>
    %45 = tpu.matmul %31, %44, %cst_20 {dimension_numbers = #tpu.dot_dimension_numbers<[1], [0], [0], [1], [0, 0, 1, 1], [], []>} : vector<8x256xf32>, vector<256x4xf32>, vector<8x4xf32> -> vector<8x4xf32>
    %c0_21 = arith.constant 0 : index
    %c0_22 = arith.constant 0 : index
    %46 = vector.load %arg6[%c0_21, %c0_22] : memref<1x256xf32, #tpu.memory_space<vmem>>, vector<1x256xf32>
    %47 = vector.broadcast %46 : vector<1x256xf32> to vector<8x256xf32>
    %48 = arith.mulf %31, %47 : vector<8x256xf32>
    %cst_23 = arith.constant dense<0.000000e+00> : vector<8x4xf32>
    %49 = tpu.matmul %48, %44, %cst_23 {dimension_numbers = #tpu.dot_dimension_numbers<[1], [0], [0], [1], [0, 0, 1, 1], [], []>} : vector<8x256xf32>, vector<256x4xf32>, vector<8x4xf32> -> vector<8x4xf32>
    %50 = tpu.reciprocal %45 {approx = true} : vector<8x4xf32> -> vector<8x4xf32>
    %51 = arith.mulf %49, %50 : vector<8x4xf32>
    %c0_24 = arith.constant 0 : index
    %c0_25 = arith.constant 0 : index
    %52 = vector.load %arg7[%c0_24, %c0_25] : memref<8x4xf32, #tpu.memory_space<vmem>>, vector<8x4xf32>
    tpu.vector_store %arg7[%c0_24, %c0_25], %51 {strides = array<i32>} : memref<8x4xf32, #tpu.memory_space<vmem>>, vector<8x4xf32>,
    return
  }
}

</mosaic_0001>

<llo_original>
// kernel: nec_forward.1
$region0: #{nec_forward.1}
  #allocation0 [shape = 'u32[]', space=smem, size = 0x4, offset = 0x4, fixed_abs, tag = 'smem constant byte address 0x4 - core index']
  #allocation1 [shape = 'u32[144,128]{1,0:T(1,128)}', space=vmem, size = 0x12000, scoped, tag = 'internal scratch']
  %s0 = inlined_call_operand.vmem [shape: f32[8,1024], index: 0, kind: input, shape index: {}]
  %s1 = inlined_call_operand.vmem [shape: f32[1024,64], index: 1, kind: input, shape index: {}]
  %s2 = inlined_call_operand.vmem [shape: f32[1,64], index: 2, kind: input, shape index: {}]
  %s3 = inlined_call_operand.vmem [shape: f32[64,32], index: 3, kind: input, shape index: {}]
  %s4 = inlined_call_operand.vmem [shape: f32[1,32], index: 4, kind: input, shape index: {}]
  %s5 = inlined_call_operand.vmem [shape: f32[32,256], index: 5, kind: input, shape index: {}]
  %s6 = inlined_call_operand.vmem [shape: f32[1,256], index: 6, kind: input, shape index: {}]
  %s7 = inlined_call_operand.vmem [shape: f32[8,4], index: 7, kind: output, shape index: {}]
  %s8 = sld [smem:[#allocation0]]
  $region38: #{nec_forward.1} parent=0
    _
  %s10 = ssub.s32 1, %s8
  %s11 = scalar_select 0, %s10, %s8
  // Predicated region
  $region2: #{nec_forward.1} parent=0 // pred_check
    _
  $region3: #{nec_forward.1} parent=0 // pred_check_branch
    %13 = sbr.rel (0) target = $region5
  $region4: #{nec_forward.1} parent=0 // pred_region
    _
  $region5: #{nec_forward.1} parent=0 // pred_fallthru
    _
  // Predicated region
  $region6: #{nec_forward.1} parent=0 // pred_check
    _
  $region7: #{nec_forward.1} parent=0 // pred_check_branch
    %15 = sbr.rel (0) target = $region9
  $region8: #{nec_forward.1} parent=0 // pred_region
    _
  $region9: #{nec_forward.1} parent=0 // pred_fallthru
    _
  // Predicated region
  $region10: #{nec_forward.1} parent=0 // pred_check
    _
  $region11: #{nec_forward.1} parent=0 // pred_check_branch
    %17 = sbr.rel (0) target = $region13
  $region12: #{nec_forward.1} parent=0 // pred_region
    _
  $region13: #{nec_forward.1} parent=0 // pred_fallthru
    _
  // Predicated region
  $region14: #{nec_forward.1} parent=0 // pred_check
    _
  $region15: #{nec_forward.1} parent=0 // pred_check_branch
    %19 = sbr.rel (0) target = $region17
  $region16: #{nec_forward.1} parent=0 // pred_region
    _
  $region17: #{nec_forward.1} parent=0 // pred_fallthru
    _
  // Predicated region
  $region18: #{nec_forward.1} parent=0 // pred_check
    _
  $region19: #{nec_forward.1} parent=0 // pred_check_branch
    %21 = sbr.rel (0) target = $region21
  $region20: #{nec_forward.1} parent=0 // pred_region
    _
  $region21: #{nec_forward.1} parent=0 // pred_fallthru
    _
  // Predicated region
  $region22: #{nec_forward.1} parent=0 // pred_check
    _
  $region23: #{nec_forward.1} parent=0 // pred_check_branch
    %23 = sbr.rel (0) target = $region25
  $region24: #{nec_forward.1} parent=0 // pred_region
    _
  $region25: #{nec_forward.1} parent=0 // pred_fallthru
    _
  // Predicated region
  $region26: #{nec_forward.1} parent=0 // pred_check
    _
  $region27: #{nec_forward.1} parent=0 // pred_check_branch
    %25 = sbr.rel (0) target = $region29
  $region28: #{nec_forward.1} parent=0 // pred_region
    _
  $region29: #{nec_forward.1} parent=0 // pred_fallthru
    _
  %v26 = vld [vmem:[%s0] sm:$0xff]
  %v27 = vld [vmem:[%s0 + $0x8] sm:$0xff]
  %v28 = vld [vmem:[%s0 + $0x10] sm:$0xff]
  %v29 = vld [vmem:[%s0 + $0x18] sm:$0xff]
  %v30 = vld [vmem:[%s0 + $0x20] sm:$0xff]
  %v31 = vld [vmem:[%s0 + $0x28] sm:$0xff]
  %v32 = vld [vmem:[%s0 + $0x30] sm:$0xff]
  %v33 = vld [vmem:[%s0 + $0x38] sm:$0xff]
  %v34 = vld [vmem:[%s1] sm:$0xff]
  %v35 = vld [vmem:[%s1 + $0x8] sm:$0xff]
  %v36 = vld [vmem:[%s1 + $0x10] sm:$0xff]
  %v37 = vld [vmem:[%s1 + $0x18] sm:$0xff]
  %v38 = vld [vmem:[%s1 + $0x20] sm:$0xff]
  %v39 = vld [vmem:[%s1 + $0x28] sm:$0xff]
  %v40 = vld [vmem:[%s1 + $0x30] sm:$0xff]
  %v41 = vld [vmem:[%s1 + $0x38] sm:$0xff]
  %v42 = vld [vmem:[%s1 + $0x40] sm:$0xff]
  %v43 = vld [vmem:[%s1 + $0x48] sm:$0xff]
  %v44 = vld [vmem:[%s1 + $0x50] sm:$0xff]
  %v45 = vld [vmem:[%s1 + $0x58] sm:$0xff]
  %v46 = vld [vmem:[%s1 + $0x60] sm:$0xff]
  %v47 = vld [vmem:[%s1 + $0x68] sm:$0xff]
  %v48 = vld [vmem:[%s1 + $0x70] sm:$0xff]
  %v49 = vld [vmem:[%s1 + $0x78] sm:$0xff]
  %v50 = vld [vmem:[%s1 + $0x80] sm:$0xff]
  %v51 = vld [vmem:[%s1 + $0x88] sm:$0xff]
  %v52 = vld [vmem:[%s1 + $0x90] sm:$0xff]
  %v53 = vld [vmem:[%s1 + $0x98] sm:$0xff]
  %v54 = vld [vmem:[%s1 + $0xa0] sm:$0xff]
  %v55 = vld [vmem:[%s1 + $0xa8] sm:$0xff]
  %v56 = vld [vmem:[%s1 + $0xb0] sm:$0xff]
  %v57 = vld [vmem:[%s1 + $0xb8] sm:$0xff]
  %v58 = vld [vmem:[%s1 + $0xc0] sm:$0xff]
  %v59 = vld [vmem:[%s1 + $0xc8] sm:$0xff]
  %v60 = vld [vmem:[%s1 + $0xd0] sm:$0xff]
  %v61 = vld [vmem:[%s1 + $0xd8] sm:$0xff]
  %v62 = vld [vmem:[%s1 + $0xe0] sm:$0xff]
  %v63 = vld [vmem:[%s1 + $0xe8] sm:$0xff]
  %v64 = vld [vmem:[%s1 + $0xf0] sm:$0xff]
  %v65 = vld [vmem:[%s1 + $0xf8] sm:$0xff]
  %v66 = vld [vmem:[%s1 + $0x100] sm:$0xff]
  %v67 = vld [vmem:[%s1 + $0x108] sm:$0xff]
  %v68 = vld [vmem:[%s1 + $0x110] sm:$0xff]
  %v69 = vld [vmem:[%s1 + $0x118] sm:$0xff]
  %v70 = vld [vmem:[%s1 + $0x120] sm:$0xff]
  %v71 = vld [vmem:[%s1 + $0x128] sm:$0xff]
  %v72 = vld [vmem:[%s1 + $0x130] sm:$0xff]
  %v73 = vld [vmem:[%s1 + $0x138] sm:$0xff]
  %v74 = vld [vmem:[%s1 + $0x140] sm:$0xff]
  %v75 = vld [vmem:[%s1 + $0x148] sm:$0xff]
  %v76 = vld [vmem:[%s1 + $0x150] sm:$0xff]
  %v77 = vld [vmem:[%s1 + $0x158] sm:$0xff]
  %v78 = vld [vmem:[%s1 + $0x160] sm:$0xff]
  %v79 = vld [vmem:[%s1 + $0x168] sm:$0xff]
  %v80 = vld [vmem:[%s1 + $0x170] sm:$0xff]
  %v81 = vld [vmem:[%s1 + $0x178] sm:$0xff]
  %v82 = vld [vmem:[%s1 + $0x180] sm:$0xff]
  %v83 = vld [vmem:[%s1 + $0x188] sm:$0xff]
  %v84 = vld [vmem:[%s1 + $0x190] sm:$0xff]
  %v85 = vld [vmem:[%s1 + $0x198] sm:$0xff]
  %v86 = vld [vmem:[%s1 + $0x1a0] sm:$0xff]
  %v87 = vld [vmem:[%s1 + $0x1a8] sm:$0xff]
  %v88 = vld [vmem:[%s1 + $0x1b0] sm:$0xff]
  %v89 = vld [vmem:[%s1 + $0x1b8] sm:$0xff]
  %v90 = vld [vmem:[%s1 + $0x1c0] sm:$0xff]
  %v91 = vld [vmem:[%s1 + $0x1c8] sm:$0xff]
  %v92 = vld [vmem:[%s1 + $0x1d0] sm:$0xff]
  %v93 = vld [vmem:[%s1 + $0x1d8] sm:$0xff]
  %v94 = vld [vmem:[%s1 + $0x1e0] sm:$0xff]
  %v95 = vld [vmem:[%s1 + $0x1e8] sm:$0xff]
  %v96 = vld [vmem:[%s1 + $0x1f0] sm:$0xff]
  %v97 = vld [vmem:[%s1 + $0x1f8] sm:$0xff]
  %v98 = vld [vmem:[%s1 + $0x200] sm:$0xff]
  %v99 = vld [vmem:[%s1 + $0x208] sm:$0xff]
  %v100 = vld [vmem:[%s1 + $0x210] sm:$0xff]
  %v101 = vld [vmem:[%s1 + $0x218] sm:$0xff]
  %v102 = vld [vmem:[%s1 + $0x220] sm:$0xff]
  %v103 = vld [vmem:[%s1 + $0x228] sm:$0xff]
  %v104 = vld [vmem:[%s1 + $0x230] sm:$0xff]
  %v105 = vld [vmem:[%s1 + $0x238] sm:$0xff]
  %v106 = vld [vmem:[%s1 + $0x240] sm:$0xff]
  %v107 = vld [vmem:[%s1 + $0x248] sm:$0xff]
  %v108 = vld [vmem:[%s1 + $0x250] sm:$0xff]
  %v109 = vld [vmem:[%s1 + $0x258] sm:$0xff]
  %v110 = vld [vmem:[%s1 + $0x260] sm:$0xff]
  %v111 = vld [vmem:[%s1 + $0x268] sm:$0xff]
  %v112 = vld [vmem:[%s1 + $0x270] sm:$0xff]
  %v113 = vld [vmem:[%s1 + $0x278] sm:$0xff]
  %v114 = vld [vmem:[%s1 + $0x280] sm:$0xff]
  %v115 = vld [vmem:[%s1 + $0x288] sm:$0xff]
  %v116 = vld [vmem:[%s1 + $0x290] sm:$0xff]
  %v117 = vld [vmem:[%s1 + $0x298] sm:$0xff]
  %v118 = vld [vmem:[%s1 + $0x2a0] sm:$0xff]
  %v119 = vld [vmem:[%s1 + $0x2a8] sm:$0xff]
  %v120 = vld [vmem:[%s1 + $0x2b0] sm:$0xff]
  %v121 = vld [vmem:[%s1 + $0x2b8] sm:$0xff]
  %v122 = vld [vmem:[%s1 + $0x2c0] sm:$0xff]
  %v123 = vld [vmem:[%s1 + $0x2c8] sm:$0xff]
  %v124 = vld [vmem:[%s1 + $0x2d0] sm:$0xff]
  %v125 = vld [vmem:[%s1 + $0x2d8] sm:$0xff]
  %v126 = vld [vmem:[%s1 + $0x2e0] sm:$0xff]
  %v127 = vld [vmem:[%s1 + $0x2e8] sm:$0xff]
  %v128 = vld [vmem:[%s1 + $0x2f0] sm:$0xff]
  %v129 = vld [vmem:[%s1 + $0x2f8] sm:$0xff]
  %v130 = vld [vmem:[%s1 + $0x300] sm:$0xff]
  %v131 = vld [vmem:[%s1 + $0x308] sm:$0xff]
  %v132 = vld [vmem:[%s1 + $0x310] sm:$0xff]
  %v133 = vld [vmem:[%s1 + $0x318] sm:$0xff]
  %v134 = vld [vmem:[%s1 + $0x320] sm:$0xff]
  %v135 = vld [vmem:[%s1 + $0x328] sm:$0xff]
  %v136 = vld [vmem:[%s1 + $0x330] sm:$0xff]
  %v137 = vld [vmem:[%s1 + $0x338] sm:$0xff]
  %v138 = vld [vmem:[%s1 + $0x340] sm:$0xff]
  %v139 = vld [vmem:[%s1 + $0x348] sm:$0xff]
  %v140 = vld [vmem:[%s1 + $0x350] sm:$0xff]
  %v141 = vld [vmem:[%s1 + $0x358] sm:$0xff]
  %v142 = vld [vmem:[%s1 + $0x360] sm:$0xff]
  %v143 = vld [vmem:[%s1 + $0x368] sm:$0xff]
  %v144 = vld [vmem:[%s1 + $0x370] sm:$0xff]
  %v145 = vld [vmem:[%s1 + $0x378] sm:$0xff]
  %v146 = vld [vmem:[%s1 + $0x380] sm:$0xff]
  %v147 = vld [vmem:[%s1 + $0x388] sm:$0xff]
  %v148 = vld [vmem:[%s1 + $0x390] sm:$0xff]
  %v149 = vld [vmem:[%s1 + $0x398] sm:$0xff]
  %v150 = vld [vmem:[%s1 + $0x3a0] sm:$0xff]
  %v151 = vld [vmem:[%s1 + $0x3a8] sm:$0xff]
  %v152 = vld [vmem:[%s1 + $0x3b0] sm:$0xff]
  %v153 = vld [vmem:[%s1 + $0x3b8] sm:$0xff]
  %v154 = vld [vmem:[%s1 + $0x3c0] sm:$0xff]
  %v155 = vld [vmem:[%s1 + $0x3c8] sm:$0xff]
  %v156 = vld [vmem:[%s1 + $0x3d0] sm:$0xff]
  %v157 = vld [vmem:[%s1 + $0x3d8] sm:$0xff]
  %v158 = vld [vmem:[%s1 + $0x3e0] sm:$0xff]
  %v159 = vld [vmem:[%s1 + $0x3e8] sm:$0xff]
  %v160 = vld [vmem:[%s1 + $0x3f0] sm:$0xff]
  %v161 = vld [vmem:[%s1 + $0x3f8] sm:$0xff]
  %v162 = vld [vmem:[%s2] sm:$0x1]
  %v164 = vlaneseq
  %v165 = vshrl.u32 %v164, 7
  %v166 = vsub.s32 0, %v165
  %v167 = vrot.slane %v162, %v166
  %169 = vmatprep.subr.mxu0 0.0
  %170 = vmatpush1.msra.mxu0 %v49
  %171 = vmatprep.subr.mxu0 0.0
  %172 = vmatpush1.msra.mxu0 %v48
  %173 = vmatprep.subr.mxu0 0.0
  %174 = vmatpush1.msra.mxu0 %v47
  %175 = vmatprep.subr.mxu0 0.0
  %176 = vmatpush1.msra.mxu0 %v46
  %177 = vmatprep.subr.mxu0 0.0
  %178 = vmatpush1.msra.mxu0 %v45
  %179 = vmatprep.subr.mxu0 0.0
  %180 = vmatpush1.msra.mxu0 %v44
  %181 = vmatprep.subr.mxu0 0.0
  %182 = vmatpush1.msra.mxu0 %v43
  %183 = vmatprep.subr.mxu0 0.0
  %184 = vmatpush1.msra.mxu0 %v42
  %185 = vmatprep.subr.mxu0 0.0
  %186 = vmatpush1.msra.mxu0 %v41
  %187 = vmatprep.subr.mxu0 0.0
  %188 = vmatpush1.msra.mxu0 %v40
  %189 = vmatprep.subr.mxu0 0.0
  %190 = vmatpush1.msra.mxu0 %v39
  %191 = vmatprep.subr.mxu0 0.0
  %192 = vmatpush1.msra.mxu0 %v38
  %193 = vmatprep.subr.mxu0 0.0
  %194 = vmatpush1.msra.mxu0 %v37
  %195 = vmatprep.subr.mxu0 0.0
  %196 = vmatpush1.msra.mxu0 %v36
  %197 = vmatprep.subr.mxu0 0.0
  %198 = vmatpush1.msra.mxu0 %v35
  %199 = vmatprep.subr.mxu0 0.0
  %200 = vmatpush1.msra.mxu0 %v34
  %201 = vmatprep.subr.mxu0 0.0
  %202 = vmatpush2.msra.mxu0 %v65
  %203 = vmatprep.subr.mxu0 0.0
  %204 = vmatpush2.msra.mxu0 %v64
  %205 = vmatprep.subr.mxu0 0.0
  %206 = vmatpush2.msra.mxu0 %v63
  %207 = vmatprep.subr.mxu0 0.0
  %208 = vmatpush2.msra.mxu0 %v62
  %209 = vmatprep.subr.mxu0 0.0
  %210 = vmatpush2.msra.mxu0 %v61
  %211 = vmatprep.subr.mxu0 0.0
  %212 = vmatpush2.msra.mxu0 %v60
  %213 = vmatprep.subr.mxu0 0.0
  %214 = vmatpush2.msra.mxu0 %v59
  %215 = vmatprep.subr.mxu0 0.0
  %216 = vmatpush2.msra.mxu0 %v58
  %217 = vmatprep.subr.mxu0 0.0
  %218 = vmatpush2.msra.mxu0 %v57
  %219 = vmatprep.subr.mxu0 0.0
  %220 = vmatpush2.msra.mxu0 %v56
  %221 = vmatprep.subr.mxu0 0.0
  %222 = vmatpush2.msra.mxu0 %v55
  %223 = vmatprep.subr.mxu0 0.0
  %224 = vmatpush2.msra.mxu0 %v54
  %225 = vmatprep.subr.mxu0 0.0
  %226 = vmatpush2.msra.mxu0 %v53
  %227 = vmatprep.subr.mxu0 0.0
  %228 = vmatpush2.msra.mxu0 %v52
  %229 = vmatprep.subr.mxu0 0.0
  %230 = vmatpush2.msra.mxu0 %v51
  %231 = vmatprep.subr.mxu0 0.0
  %232 = vmatpush2.msra.mxu0 %v50
  %233 = vmatprep.mubr.f32.mxu0 %v27
  %234 = vmatmul.mubr.f32.gmra.mxu0 %v26
  %v235 = vpop.f32.mrf.mxu0
  %v236 = vadd.f32 %v167, %v235
  %v237 = vpop.f32.mrf.mxu0
  %238 = vdwg.mxu0
  %239 = vmatprep.subr.mxu0 0.0
  %240 = vmatpush1.msra.mxu0 %v81
  %241 = vmatprep.subr.mxu0 0.0
  %242 = vmatpush1.msra.mxu0 %v80
  %243 = vmatprep.subr.mxu0 0.0
  %244 = vmatpush1.msra.mxu0 %v79
  %245 = vmatprep.subr.mxu0 0.0
  %246 = vmatpush1.msra.mxu0 %v78
  %247 = vmatprep.subr.mxu0 0.0
  %248 = vmatpush1.msra.mxu0 %v77
  %249 = vmatprep.subr.mxu0 0.0
  %250 = vmatpush1.msra.mxu0 %v76
  %251 = vmatprep.subr.mxu0 0.0
  %252 = vmatpush1.msra.mxu0 %v75
  %253 = vmatprep.subr.mxu0 0.0
  %254 = vmatpush1.msra.mxu0 %v74
  %255 = vmatprep.subr.mxu0 0.0
  %256 = vmatpush1.msra.mxu0 %v73
  %257 = vmatprep.subr.mxu0 0.0
  %258 = vmatpush1.msra.mxu0 %v72
  %259 = vmatprep.subr.mxu0 0.0
  %260 = vmatpush1.msra.mxu0 %v71
  %261 = vmatprep.subr.mxu0 0.0
  %262 = vmatpush1.msra.mxu0 %v70
  %263 = vmatprep.subr.mxu0 0.0
  %264 = vmatpush1.msra.mxu0 %v69
  %265 = vmatprep.subr.mxu0 0.0
  %266 = vmatpush1.msra.mxu0 %v68
  %267 = vmatprep.subr.mxu0 0.0
  %268 = vmatpush1.msra.mxu0 %v67
  %269 = vmatprep.subr.mxu0 0.0
  %270 = vmatpush1.msra.mxu0 %v66
  %271 = vmatprep.subr.mxu0 0.0
  %272 = vmatpush2.msra.mxu0 %v97
  %273 = vmatprep.subr.mxu0 0.0
  %274 = vmatpush2.msra.mxu0 %v96
  %275 = vmatprep.subr.mxu0 0.0
  %276 = vmatpush2.msra.mxu0 %v95
  %277 = vmatprep.subr.mxu0 0.0
  %278 = vmatpush2.msra.mxu0 %v94
  %279 = vmatprep.subr.mxu0 0.0
  %280 = vmatpush2.msra.mxu0 %v93
  %281 = vmatprep.subr.mxu0 0.0
  %282 = vmatpush2.msra.mxu0 %v92
  %283 = vmatprep.subr.mxu0 0.0
  %284 = vmatpush2.msra.mxu0 %v91
  %285 = vmatprep.subr.mxu0 0.0
  %286 = vmatpush2.msra.mxu0 %v90
  %287 = vmatprep.subr.mxu0 0.0
  %288 = vmatpush2.msra.mxu0 %v89
  %289 = vmatprep.subr.mxu0 0.0
  %290 = vmatpush2.msra.mxu0 %v88
  %291 = vmatprep.subr.mxu0 0.0
  %292 = vmatpush2.msra.mxu0 %v87
  %293 = vmatprep.subr.mxu0 0.0
  %294 = vmatpush2.msra.mxu0 %v86
  %295 = vmatprep.subr.mxu0 0.0
  %296 = vmatpush2.msra.mxu0 %v85
  %297 = vmatprep.subr.mxu0 0.0
  %298 = vmatpush2.msra.mxu0 %v84
  %299 = vmatprep.subr.mxu0 0.0
  %300 = vmatpush2.msra.mxu0 %v83
  %301 = vmatprep.subr.mxu0 0.0
  %302 = vmatpush2.msra.mxu0 %v82
  %303 = vmatprep.mubr.f32.mxu0 %v29
  %304 = vmatmul.mubr.f32.gmra.mxu0 %v28
  %v305 = vpop.f32.mrf.mxu0
  %v306 = vadd.f32 %v236, %v305
  %v307 = vpop.f32.mrf.mxu0
  %308 = vdwg.mxu0
  %309 = vmatprep.subr.mxu0 0.0
  %310 = vmatpush1.msra.mxu0 %v113
  %311 = vmatprep.subr.mxu0 0.0
  %312 = vmatpush1.msra.mxu0 %v112
  %313 = vmatprep.subr.mxu0 0.0
  %314 = vmatpush1.msra.mxu0 %v111
  %315 = vmatprep.subr.mxu0 0.0
  %316 = vmatpush1.msra.mxu0 %v110
  %317 = vmatprep.subr.mxu0 0.0
  %318 = vmatpush1.msra.mxu0 %v109
  %319 = vmatprep.subr.mxu0 0.0
  %320 = vmatpush1.msra.mxu0 %v108
  %321 = vmatprep.subr.mxu0 0.0
  %322 = vmatpush1.msra.mxu0 %v107
  %323 = vmatprep.subr.mxu0 0.0
  %324 = vmatpush1.msra.mxu0 %v106
  %325 = vmatprep.subr.mxu0 0.0
  %326 = vmatpush1.msra.mxu0 %v105
  %327 = vmatprep.subr.mxu0 0.0
  %328 = vmatpush1.msra.mxu0 %v104
  %329 = vmatprep.subr.mxu0 0.0
  %330 = vmatpush1.msra.mxu0 %v103
  %331 = vmatprep.subr.mxu0 0.0
  %332 = vmatpush1.msra.mxu0 %v102
  %333 = vmatprep.subr.mxu0 0.0
  %334 = vmatpush1.msra.mxu0 %v101
  %335 = vmatprep.subr.mxu0 0.0
  %336 = vmatpush1.msra.mxu0 %v100
  %337 = vmatprep.subr.mxu0 0.0
  %338 = vmatpush1.msra.mxu0 %v99
  %339 = vmatprep.subr.mxu0 0.0
  %340 = vmatpush1.msra.mxu0 %v98
  %341 = vmatprep.subr.mxu0 0.0
  %342 = vmatpush2.msra.mxu0 %v129
  %343 = vmatprep.subr.mxu0 0.0
  %344 = vmatpush2.msra.mxu0 %v128
  %345 = vmatprep.subr.mxu0 0.0
  %346 = vmatpush2.msra.mxu0 %v127
  %347 = vmatprep.subr.mxu0 0.0
  %348 = vmatpush2.msra.mxu0 %v126
  %349 = vmatprep.subr.mxu0 0.0
  %350 = vmatpush2.msra.mxu0 %v125
  %351 = vmatprep.subr.mxu0 0.0
  %352 = vmatpush2.msra.mxu0 %v124
  %353 = vmatprep.subr.mxu0 0.0
  %354 = vmatpush2.msra.mxu0 %v123
  %355 = vmatprep.subr.mxu0 0.0
  %356 = vmatpush2.msra.mxu0 %v122
  %357 = vmatprep.subr.mxu0 0.0
  %358 = vmatpush2.msra.mxu0 %v121
  %359 = vmatprep.subr.mxu0 0.0
  %360 = vmatpush2.msra.mxu0 %v120
  %361 = vmatprep.subr.mxu0 0.0
  %362 = vmatpush2.msra.mxu0 %v119
  %363 = vmatprep.subr.mxu0 0.0
  %364 = vmatpush2.msra.mxu0 %v118
  %365 = vmatprep.subr.mxu0 0.0
  %366 = vmatpush2.msra.mxu0 %v117
  %367 = vmatprep.subr.mxu0 0.0
  %368 = vmatpush2.msra.mxu0 %v116
  %369 = vmatprep.subr.mxu0 0.0
  %370 = vmatpush2.msra.mxu0 %v115
  %371 = vmatprep.subr.mxu0 0.0
  %372 = vmatpush2.msra.mxu0 %v114
  %373 = vmatprep.mubr.f32.mxu0 %v31
  %374 = vmatmul.mubr.f32.gmra.mxu0 %v30
  %v375 = vpop.f32.mrf.mxu0
  %v376 = vadd.f32 %v306, %v375
  %v377 = vpop.f32.mrf.mxu0
  %378 = vdwg.mxu0
  %379 = vmatprep.subr.mxu0 0.0
  %380 = vmatpush1.msra.mxu0 %v145
  %381 = vmatprep.subr.mxu0 0.0
  %382 = vmatpush1.msra.mxu0 %v144
  %383 = vmatprep.subr.mxu0 0.0
  %384 = vmatpush1.msra.mxu0 %v143
  %385 = vmatprep.subr.mxu0 0.0
  %386 = vmatpush1.msra.mxu0 %v142
  %387 = vmatprep.subr.mxu0 0.0
  %388 = vmatpush1.msra.mxu0 %v141
  %389 = vmatprep.subr.mxu0 0.0
  %390 = vmatpush1.msra.mxu0 %v140
  %391 = vmatprep.subr.mxu0 0.0
  %392 = vmatpush1.msra.mxu0 %v139
  %393 = vmatprep.subr.mxu0 0.0
  %394 = vmatpush1.msra.mxu0 %v138
  %395 = vmatprep.subr.mxu0 0.0
  %396 = vmatpush1.msra.mxu0 %v137
  %397 = vmatprep.subr.mxu0 0.0
  %398 = vmatpush1.msra.mxu0 %v136
  %399 = vmatprep.subr.mxu0 0.0
  %400 = vmatpush1.msra.mxu0 %v135
  %401 = vmatprep.subr.mxu0 0.0
  %402 = vmatpush1.msra.mxu0 %v134
  %403 = vmatprep.subr.mxu0 0.0
  %404 = vmatpush1.msra.mxu0 %v133
  %405 = vmatprep.subr.mxu0 0.0
  %406 = vmatpush1.msra.mxu0 %v132
  %407 = vmatprep.subr.mxu0 0.0
  %408 = vmatpush1.msra.mxu0 %v131
  %409 = vmatprep.subr.mxu0 0.0
  %410 = vmatpush1.msra.mxu0 %v130
  %411 = vmatprep.subr.mxu0 0.0
  %412 = vmatpush2.msra.mxu0 %v161
  %413 = vmatprep.subr.mxu0 0.0
  %414 = vmatpush2.msra.mxu0 %v160
  %415 = vmatprep.subr.mxu0 0.0
  %416 = vmatpush2.msra.mxu0 %v159
  %417 = vmatprep.subr.mxu0 0.0
  %418 = vmatpush2.msra.mxu0 %v158
  %419 = vmatprep.subr.mxu0 0.0
  %420 = vmatpush2.msra.mxu0 %v157
  %421 = vmatprep.subr.mxu0 0.0
  %422 = vmatpush2.msra.mxu0 %v156
  %423 = vmatprep.subr.mxu0 0.0
  %424 = vmatpush2.msra.mxu0 %v155
  %425 = vmatprep.subr.mxu0 0.0
  %426 = vmatpush2.msra.mxu0 %v154
  %427 = vmatprep.subr.mxu0 0.0
  %428 = vmatpush2.msra.mxu0 %v153
  %429 = vmatprep.subr.mxu0 0.0
  %430 = vmatpush2.msra.mxu0 %v152
  %431 = vmatprep.subr.mxu0 0.0
  %432 = vmatpush2.msra.mxu0 %v151
  %433 = vmatprep.subr.mxu0 0.0
  %434 = vmatpush2.msra.mxu0 %v150
  %435 = vmatprep.subr.mxu0 0.0
  %436 = vmatpush2.msra.mxu0 %v149
  %437 = vmatprep.subr.mxu0 0.0
  %438 = vmatpush2.msra.mxu0 %v148
  %439 = vmatprep.subr.mxu0 0.0
  %440 = vmatpush2.msra.mxu0 %v147
  %441 = vmatprep.subr.mxu0 0.0
  %442 = vmatpush2.msra.mxu0 %v146
  %443 = vmatprep.mubr.f32.mxu0 %v33
  %444 = vmatmul.mubr.f32.gmra.mxu0 %v32
  %v445 = vpop.f32.mrf.mxu0
  %v446 = vadd.f32 %v376, %v445
  %v447 = vpop.f32.mrf.mxu0
  %448 = vdwg.mxu0
  %v449 = vmax.f32 %v446, 0.0
  %v450 = vld [vmem:[%s3] sm:$0xff]
  %v451 = vld [vmem:[%s3 + $0x8] sm:$0xff]
  %v452 = vld [vmem:[%s3 + $0x10] sm:$0xff]
  %v453 = vld [vmem:[%s3 + $0x18] sm:$0xff]
  %v454 = vld [vmem:[%s3 + $0x20] sm:$0xff]
  %v455 = vld [vmem:[%s3 + $0x28] sm:$0xff]
  %v456 = vld [vmem:[%s3 + $0x30] sm:$0xff]
  %v457 = vld [vmem:[%s3 + $0x38] sm:$0xff]
  %v458 = vld [vmem:[%s4] sm:$0x1]
  %v460 = vlaneseq
  %v461 = vshrl.u32 %v460, 7
  %v462 = vsub.s32 0, %v461
  %v463 = vrot.slane %v458, %v462
  %vm465 = vcmask 523264
  %v467 = vsel %vm465, %v449, 0
  %469 = vmatprep.subr.mxu0 0.0
  %470 = vmatpush1.msra.mxu0 0.0
  %471 = vmatprep.subr.mxu0 0.0
  %472 = vmatpush1.msra.mxu0 0.0
  %473 = vmatprep.subr.mxu0 0.0
  %474 = vmatpush1.msra.mxu0 0.0
  %475 = vmatprep.subr.mxu0 0.0
  %476 = vmatpush1.msra.mxu0 0.0
  %477 = vmatprep.subr.mxu0 0.0
  %478 = vmatpush1.msra.mxu0 0.0
  %479 = vmatprep.subr.mxu0 0.0
  %480 = vmatpush1.msra.mxu0 0.0
  %481 = vmatprep.subr.mxu0 0.0
  %482 = vmatpush1.msra.mxu0 0.0
  %483 = vmatprep.subr.mxu0 0.0
  %484 = vmatpush1.msra.mxu0 0.0
  %485 = vmatprep.subr.mxu0 0.0
  %486 = vmatpush1.msra.mxu0 %v457
  %487 = vmatprep.subr.mxu0 0.0
  %488 = vmatpush1.msra.mxu0 %v456
  %489 = vmatprep.subr.mxu0 0.0
  %490 = vmatpush1.msra.mxu0 %v455
  %491 = vmatprep.subr.mxu0 0.0
  %492 = vmatpush1.msra.mxu0 %v454
  %493 = vmatprep.subr.mxu0 0.0
  %494 = vmatpush1.msra.mxu0 %v453
  %495 = vmatprep.subr.mxu0 0.0
  %496 = vmatpush1.msra.mxu0 %v452
  %497 = vmatprep.subr.mxu0 0.0
  %498 = vmatpush1.msra.mxu0 %v451
  %499 = vmatprep.subr.mxu0 0.0
  %500 = vmatpush1.msra.mxu0 %v450
  %501 = vmatprep.subr.mxu0 0.0
  %502 = vmatpush2.msra.mxu0 0.0
  %503 = vmatprep.subr.mxu0 0.0
  %504 = vmatpush2.msra.mxu0 0.0
  %505 = vmatprep.subr.mxu0 0.0
  %506 = vmatpush2.msra.mxu0 0.0
  %507 = vmatprep.subr.mxu0 0.0
  %508 = vmatpush2.msra.mxu0 0.0
  %509 = vmatprep.subr.mxu0 0.0
  %510 = vmatpush2.msra.mxu0 0.0
  %511 = vmatprep.subr.mxu0 0.0
  %512 = vmatpush2.msra.mxu0 0.0
  %513 = vmatprep.subr.mxu0 0.0
  %514 = vmatpush2.msra.mxu0 0.0
  %515 = vmatprep.subr.mxu0 0.0
  %516 = vmatpush2.msra.mxu0 0.0
  %517 = vmatprep.subr.mxu0 0.0
  %518 = vmatpush2.msra.mxu0 0.0
  %519 = vmatprep.subr.mxu0 0.0
  %520 = vmatpush2.msra.mxu0 0.0
  %521 = vmatprep.subr.mxu0 0.0
  %522 = vmatpush2.msra.mxu0 0.0
  %523 = vmatprep.subr.mxu0 0.0
  %524 = vmatpush2.msra.mxu0 0.0
  %525 = vmatprep.subr.mxu0 0.0
  %526 = vmatpush2.msra.mxu0 0.0
  %527 = vmatprep.subr.mxu0 0.0
  %528 = vmatpush2.msra.mxu0 0.0
  %529 = vmatprep.subr.mxu0 0.0
  %530 = vmatpush2.msra.mxu0 0.0
  %531 = vmatprep.subr.mxu0 0.0
  %532 = vmatpush2.msra.mxu0 0.0
  %533 = vmatprep.mubr.f32.mxu0 0.0
  %534 = vmatmul.mubr.f32.gmra.mxu0 %v467
  %v535 = vpop.f32.mrf.mxu0
  %v536 = vadd.f32 %v463, %v535
  %v537 = vpop.f32.mrf.mxu0
  %538 = vdwg.mxu0
  %v539 = vld [vmem:[%s5] sm:$0xff]
  %v540 = vld [vmem:[%s5 + $0x8] sm:$0xff]
  %v541 = vld [vmem:[%s5 + $0x10] sm:$0xff]
  %v542 = vld [vmem:[%s5 + $0x18] sm:$0xff]
  %v543 = vld [vmem:[%s5 + $0x20] sm:$0xff]
  %v544 = vld [vmem:[%s5 + $0x28] sm:$0xff]
  %v545 = vld [vmem:[%s5 + $0x30] sm:$0xff]
  %v546 = vld [vmem:[%s5 + $0x38] sm:$0xff]
  %vm547 = vcmask 261120
  %v549 = vsel %vm547, %v536, 0
  %551 = vmatprep.subr.mxu0 0.0
  %552 = vmatpush1.msra.mxu0 0.0
  %553 = vmatprep.subr.mxu0 0.0
  %554 = vmatpush1.msra.mxu0 0.0
  %555 = vmatprep.subr.mxu0 0.0
  %556 = vmatpush1.msra.mxu0 0.0
  %557 = vmatprep.subr.mxu0 0.0
  %558 = vmatpush1.msra.mxu0 0.0
  %559 = vmatprep.subr.mxu0 0.0
  %560 = vmatpush1.msra.mxu0 0.0
  %561 = vmatprep.subr.mxu0 0.0
  %562 = vmatpush1.msra.mxu0 0.0
  %563 = vmatprep.subr.mxu0 0.0
  %564 = vmatpush1.msra.mxu0 0.0
  %565 = vmatprep.subr.mxu0 0.0
  %566 = vmatpush1.msra.mxu0 0.0
  %567 = vmatprep.subr.mxu0 0.0
  %568 = vmatpush1.msra.mxu0 0.0
  %569 = vmatprep.subr.mxu0 0.0
  %570 = vmatpush1.msra.mxu0 0.0
  %571 = vmatprep.subr.mxu0 0.0
  %572 = vmatpush1.msra.mxu0 0.0
  %573 = vmatprep.subr.mxu0 0.0
  %574 = vmatpush1.msra.mxu0 0.0
  %575 = vmatprep.subr.mxu0 %v546
  %576 = vmatpush1.msra.mxu0 %v545
  %577 = vmatprep.subr.mxu0 %v544
  %578 = vmatpush1.msra.mxu0 %v543
  %579 = vmatprep.subr.mxu0 %v542
  %580 = vmatpush1.msra.mxu0 %v541
  %581 = vmatprep.subr.mxu0 %v540
  %582 = vmatpush1.msra.mxu0 %v539
  %583 = vmatprep.subr.mxu0 0.0
  %584 = vmatpush2.msra.mxu0 0.0
  %585 = vmatprep.subr.mxu0 0.0
  %586 = vmatpush2.msra.mxu0 0.0
  %587 = vmatprep.subr.mxu0 0.0
  %588 = vmatpush2.msra.mxu0 0.0
  %589 = vmatprep.subr.mxu0 0.0
  %590 = vmatpush2.msra.mxu0 0.0
  %591 = vmatprep.subr.mxu0 0.0
  %592 = vmatpush2.msra.mxu0 0.0
  %593 = vmatprep.subr.mxu0 0.0
  %594 = vmatpush2.msra.mxu0 0.0
  %595 = vmatprep.subr.mxu0 0.0
  %596 = vmatpush2.msra.mxu0 0.0
  %597 = vmatprep.subr.mxu0 0.0
  %598 = vmatpush2.msra.mxu0 0.0
  %599 = vmatprep.subr.mxu0 0.0
  %600 = vmatpush2.msra.mxu0 0.0
  %601 = vmatprep.subr.mxu0 0.0
  %602 = vmatpush2.msra.mxu0 0.0
  %603 = vmatprep.subr.mxu0 0.0
  %604 = vmatpush2.msra.mxu0 0.0
  %605 = vmatprep.subr.mxu0 0.0
  %606 = vmatpush2.msra.mxu0 0.0
  %607 = vmatprep.subr.mxu0 0.0
  %608 = vmatpush2.msra.mxu0 0.0
  %609 = vmatprep.subr.mxu0 0.0
  %610 = vmatpush2.msra.mxu0 0.0
  %611 = vmatprep.subr.mxu0 0.0
  %612 = vmatpush2.msra.mxu0 0.0
  %613 = vmatprep.subr.mxu0 0.0
  %614 = vmatpush2.msra.mxu0 0.0
  %615 = vmatprep.mubr.f32.mxu0 0.0
  %616 = vmatmul.mubr.f32.gmra.mxu0 %v549
  %v617 = vpop.f32.mrf.mxu0
  %v618 = vadd.f32 0.0, %v617
  %v619 = vpop.f32.mrf.mxu0
  %v620 = vadd.f32 0.0, %v619
  %621 = vdwg.mxu0
  %v622 = vmul.f32 %v536, %v536
  %v623 = vsel %vm547, %v622, 0.0
  %624 = vadd.xlane.f32.xlu0 %v623
  %v625 = vpop.xlane.xlu0 %624
  %v626 = vmul.f32 %v539, %v539
  %v627 = vmul.f32 %v540, %v540
  %v628 = vmul.f32 %v541, %v541
  %v629 = vmul.f32 %v542, %v542
  %v630 = vmul.f32 %v543, %v543
  %v631 = vmul.f32 %v544, %v544
  %v632 = vmul.f32 %v545, %v545
  %v633 = vmul.f32 %v546, %v546
  %v634 = vadd.f32 %v626, %v628
  %v635 = vadd.f32 %v634, %v630
  %v636 = vadd.f32 %v635, %v632
  %v637 = vrot.slane %v636, 4
  %v638 = vadd.f32 %v636, %v637
  %v639 = vrot.slane %v638, 2
  %v640 = vadd.f32 %v638, %v639
  %v641 = vrot.slane %v640, 1
  %v642 = vadd.f32 %v640, %v641
  %v643 = vadd.f32 %v627, %v629
  %v644 = vadd.f32 %v643, %v631
  %v645 = vadd.f32 %v644, %v633
  %v646 = vrot.slane %v645, 4
  %v647 = vadd.f32 %v645, %v646
  %v648 = vrot.slane %v647, 2
  %v649 = vadd.f32 %v647, %v648
  %v650 = vrot.slane %v649, 1
  %v651 = vadd.f32 %v649, %v650
  %v652 = vadd.f32 %v625, %v642
  %v653 = vadd.f32 %v625, %v651
  %v654 = vmul.f32 %v618, 2.0
  %v655 = vmul.f32 %v620, 2.0
  %v656 = vsub.f32 %v652, %v654
  %v657 = vsub.f32 %v653, %v655
  %v658 = vmax.f32 %v656, 0.0
  %v659 = vmax.f32 %v657, 0.0
  %v660 = vadd.f32 %v658, 0.001
  %v661 = vadd.f32 %v659, 0.001
  %v662 = vrcp.pop %v660
  %v663 = vrcp.pop %v661
  %v664 = vlaneseq
  %v665 = vshrl.u32 %v664, 7
  %v666 = vadd.s32 %v665, 8
  %v667 = vadd.s32 %v665, 16
  %v668 = vadd.s32 %v665, 24
  %v669 = vadd.s32 %v665, 32
  %v670 = vadd.s32 %v665, 40
  %v671 = vadd.s32 %v665, 48
  %v672 = vadd.s32 %v665, 56
  %v673 = vadd.s32 %v665, 64
  %v674 = vadd.s32 %v665, 72
  %v675 = vadd.s32 %v665, 80
  %v676 = vadd.s32 %v665, 88
  %v677 = vadd.s32 %v665, 96
  %v678 = vadd.s32 %v665, 104
  %v679 = vadd.s32 %v665, 112
  %v680 = vadd.s32 %v665, 120
  %v681 = vadd.s32 %v665, 128
  %v682 = vadd.s32 %v665, 136
  %v683 = vadd.s32 %v665, 144
  %v684 = vadd.s32 %v665, 152
  %v685 = vadd.s32 %v665, 160
  %v686 = vadd.s32 %v665, 168
  %v687 = vadd.s32 %v665, 176
  %v688 = vadd.s32 %v665, 184
  %v689 = vadd.s32 %v665, 192
  %v690 = vadd.s32 %v665, 200
  %v691 = vadd.s32 %v665, 208
  %v692 = vadd.s32 %v665, 216
  %v693 = vadd.s32 %v665, 224
  %v694 = vadd.s32 %v665, 232
  %v695 = vadd.s32 %v665, 240
  %v696 = vadd.s32 %v665, 248
  %v697 = vlaneseq
  %v698 = vand.u32 %v697, 127
  %v699 = vmul.u32 %v698, 64
  %vm700 = vcmp.ge.s32.totalorder %v665, %v699
  %vm701 = vcmp.ge.s32.totalorder %v666, %v699
  %vm702 = vcmp.ge.s32.totalorder %v667, %v699
  %vm703 = vcmp.ge.s32.totalorder %v668, %v699
  %vm704 = vcmp.ge.s32.totalorder %v669, %v699
  %vm705 = vcmp.ge.s32.totalorder %v670, %v699
  %vm706 = vcmp.ge.s32.totalorder %v671, %v699
  %vm707 = vcmp.ge.s32.totalorder %v672, %v699
  %vm708 = vcmp.ge.s32.totalorder %v673, %v699
  %vm709 = vcmp.ge.s32.totalorder %v674, %v699
  %vm710 = vcmp.ge.s32.totalorder %v675, %v699
  %vm711 = vcmp.ge.s32.totalorder %v676, %v699
  %vm712 = vcmp.ge.s32.totalorder %v677, %v699
  %vm713 = vcmp.ge.s32.totalorder %v678, %v699
  %vm714 = vcmp.ge.s32.totalorder %v679, %v699
  %vm715 = vcmp.ge.s32.totalorder %v680, %v699
  %vm716 = vcmp.ge.s32.totalorder %v681, %v699
  %vm717 = vcmp.ge.s32.totalorder %v682, %v699
  %vm718 = vcmp.ge.s32.totalorder %v683, %v699
  %vm719 = vcmp.ge.s32.totalorder %v684, %v699
  %vm720 = vcmp.ge.s32.totalorder %v685, %v699
  %vm721 = vcmp.ge.s32.totalorder %v686, %v699
  %vm722 = vcmp.ge.s32.totalorder %v687, %v699
  %vm723 = vcmp.ge.s32.totalorder %v688, %v699
  %vm724 = vcmp.ge.s32.totalorder %v689, %v699
  %vm725 = vcmp.ge.s32.totalorder %v690, %v699
  %vm726 = vcmp.ge.s32.totalorder %v691, %v699
  %vm727 = vcmp.ge.s32.totalorder %v692, %v699
  %vm728 = vcmp.ge.s32.totalorder %v693, %v699
  %vm729 = vcmp.ge.s32.totalorder %v694, %v699
  %vm730 = vcmp.ge.s32.totalorder %v695, %v699
  %vm731 = vcmp.ge.s32.totalorder %v696, %v699
  %v732 = vadd.s32 %v698, 1
  %v733 = vmul.u32 %v732, 64
  %vm734 = vcmp.lt.s32.totalorder %v665, %v733
  %vm735 = vcmp.lt.s32.totalorder %v666, %v733
  %vm736 = vcmp.lt.s32.totalorder %v667, %v733
  %vm737 = vcmp.lt.s32.totalorder %v668, %v733
  %vm738 = vcmp.lt.s32.totalorder %v669, %v733
  %vm739 = vcmp.lt.s32.totalorder %v670, %v733
  %vm740 = vcmp.lt.s32.totalorder %v671, %v733
  %vm741 = vcmp.lt.s32.totalorder %v672, %v733
  %vm742 = vcmp.lt.s32.totalorder %v673, %v733
  %vm743 = vcmp.lt.s32.totalorder %v674, %v733
  %vm744 = vcmp.lt.s32.totalorder %v675, %v733
  %vm745 = vcmp.lt.s32.totalorder %v676, %v733
  %vm746 = vcmp.lt.s32.totalorder %v677, %v733
  %vm747 = vcmp.lt.s32.totalorder %v678, %v733
  %vm748 = vcmp.lt.s32.totalorder %v679, %v733
  %vm749 = vcmp.lt.s32.totalorder %v680, %v733
  %vm750 = vcmp.lt.s32.totalorder %v681, %v733
  %vm751 = vcmp.lt.s32.totalorder %v682, %v733
  %vm752 = vcmp.lt.s32.totalorder %v683, %v733
  %vm753 = vcmp.lt.s32.totalorder %v684, %v733
  %vm754 = vcmp.lt.s32.totalorder %v685, %v733
  %vm755 = vcmp.lt.s32.totalorder %v686, %v733
  %vm756 = vcmp.lt.s32.totalorder %v687, %v733
  %vm757 = vcmp.lt.s32.totalorder %v688, %v733
  %vm758 = vcmp.lt.s32.totalorder %v689, %v733
  %vm759 = vcmp.lt.s32.totalorder %v690, %v733
  %vm760 = vcmp.lt.s32.totalorder %v691, %v733
  %vm761 = vcmp.lt.s32.totalorder %v692, %v733
  %vm762 = vcmp.lt.s32.totalorder %v693, %v733
  %vm763 = vcmp.lt.s32.totalorder %v694, %v733
  %vm764 = vcmp.lt.s32.totalorder %v695, %v733
  %vm765 = vcmp.lt.s32.totalorder %v696, %v733
  %vm766 = vmand %vm700, %vm734
  %vm767 = vmand %vm701, %vm735
  %vm768 = vmand %vm702, %vm736
  %vm769 = vmand %vm703, %vm737
  %vm770 = vmand %vm704, %vm738
  %vm771 = vmand %vm705, %vm739
  %vm772 = vmand %vm706, %vm740
  %vm773 = vmand %vm707, %vm741
  %vm774 = vmand %vm708, %vm742
  %vm775 = vmand %vm709, %vm743
  %vm776 = vmand %vm710, %vm744
  %vm777 = vmand %vm711, %vm745
  %vm778 = vmand %vm712, %vm746
  %vm779 = vmand %vm713, %vm747
  %vm780 = vmand %vm714, %vm748
  %vm781 = vmand %vm715, %vm749
  %vm782 = vmand %vm716, %vm750
  %vm783 = vmand %vm717, %vm751
  %vm784 = vmand %vm718, %vm752
  %vm785 = vmand %vm719, %vm753
  %vm786 = vmand %vm720, %vm754
  %vm787 = vmand %vm721, %vm755
  %vm788 = vmand %vm722, %vm756
  %vm789 = vmand %vm723, %vm757
  %vm790 = vmand %vm724, %vm758
  %vm791 = vmand %vm725, %vm759
  %vm792 = vmand %vm726, %vm760
  %vm793 = vmand %vm727, %vm761
  %vm794 = vmand %vm728, %vm762
  %vm795 = vmand %vm729, %vm763
  %vm796 = vmand %vm730, %vm764
  %vm797 = vmand %vm731, %vm765
  %v798 = vsel %vm766, 1, 0
  %v799 = vsel %vm767, 1, 0
  %v800 = vsel %vm768, 1, 0
  %v801 = vsel %vm769, 1, 0
  %v802 = vsel %vm770, 1, 0
  %v803 = vsel %vm771, 1, 0
  %v804 = vsel %vm772, 1, 0
  %v805 = vsel %vm773, 1, 0
  %v806 = vsel %vm774, 1, 0
  %v807 = vsel %vm775, 1, 0
  %v808 = vsel %vm776, 1, 0
  %v809 = vsel %vm777, 1, 0
  %v810 = vsel %vm778, 1, 0
  %v811 = vsel %vm779, 1, 0
  %v812 = vsel %vm780, 1, 0
  %v813 = vsel %vm781, 1, 0
  %v814 = vsel %vm782, 1, 0
  %v815 = vsel %vm783, 1, 0
  %v816 = vsel %vm784, 1, 0
  %v817 = vsel %vm785, 1, 0
  %v818 = vsel %vm786, 1, 0
  %v819 = vsel %vm787, 1, 0
  %v820 = vsel %vm788, 1, 0
  %v821 = vsel %vm789, 1, 0
  %v822 = vsel %vm790, 1, 0
  %v823 = vsel %vm791, 1, 0
  %v824 = vsel %vm792, 1, 0
  %v825 = vsel %vm793, 1, 0
  %v826 = vsel %vm794, 1, 0
  %v827 = vsel %vm795, 1, 0
  %v828 = vsel %vm796, 1, 0
  %v829 = vsel %vm797, 1, 0
  %v830 = vcvt.s32.f32 %v798
  %v831 = vcvt.s32.f32 %v799
  %v832 = vcvt.s32.f32 %v800
  %v833 = vcvt.s32.f32 %v801
  %v834 = vcvt.s32.f32 %v802
  %v835 = vcvt.s32.f32 %v803
  %v836 = vcvt.s32.f32 %v804
  %v837 = vcvt.s32.f32 %v805
  %v838 = vcvt.s32.f32 %v806
  %v839 = vcvt.s32.f32 %v807
  %v840 = vcvt.s32.f32 %v808
  %v841 = vcvt.s32.f32 %v809
  %v842 = vcvt.s32.f32 %v810
  %v843 = vcvt.s32.f32 %v811
  %v844 = vcvt.s32.f32 %v812
  %v845 = vcvt.s32.f32 %v813
  %v846 = vcvt.s32.f32 %v814
  %v847 = vcvt.s32.f32 %v815
  %v848 = vcvt.s32.f32 %v816
  %v849 = vcvt.s32.f32 %v817
  %v850 = vcvt.s32.f32 %v818
  %v851 = vcvt.s32.f32 %v819
  %v852 = vcvt.s32.f32 %v820
  %v853 = vcvt.s32.f32 %v821
  %v854 = vcvt.s32.f32 %v822
  %v855 = vcvt.s32.f32 %v823
  %v856 = vcvt.s32.f32 %v824
  %v857 = vcvt.s32.f32 %v825
  %v858 = vcvt.s32.f32 %v826
  %v859 = vcvt.s32.f32 %v827
  %v860 = vcvt.s32.f32 %v828
  %v861 = vcvt.s32.f32 %v829
  %862 = vmatprep.subr.mxu0 0.0
  %863 = vmatpush1.msra.mxu0 %v845
  %864 = vmatprep.subr.mxu0 0.0
  %865 = vmatpush1.msra.mxu0 %v844
  %866 = vmatprep.subr.mxu0 0.0
  %867 = vmatpush1.msra.mxu0 %v843
  %868 = vmatprep.subr.mxu0 0.0
  %869 = vmatpush1.msra.mxu0 %v842
  %870 = vmatprep.subr.mxu0 0.0
  %871 = vmatpush1.msra.mxu0 %v841
  %872 = vmatprep.subr.mxu0 0.0
  %873 = vmatpush1.msra.mxu0 %v840
  %874 = vmatprep.subr.mxu0 0.0
  %875 = vmatpush1.msra.mxu0 %v839
  %876 = vmatprep.subr.mxu0 0.0
  %877 = vmatpush1.msra.mxu0 %v838
  %878 = vmatprep.subr.mxu0 0.0
  %879 = vmatpush1.msra.mxu0 %v837
  %880 = vmatprep.subr.mxu0 0.0
  %881 = vmatpush1.msra.mxu0 %v836
  %882 = vmatprep.subr.mxu0 0.0
  %883 = vmatpush1.msra.mxu0 %v835
  %884 = vmatprep.subr.mxu0 0.0
  %885 = vmatpush1.msra.mxu0 %v834
  %886 = vmatprep.subr.mxu0 0.0
  %887 = vmatpush1.msra.mxu0 %v833
  %888 = vmatprep.subr.mxu0 0.0
  %889 = vmatpush1.msra.mxu0 %v832
  %890 = vmatprep.subr.mxu0 0.0
  %891 = vmatpush1.msra.mxu0 %v831
  %892 = vmatprep.subr.mxu0 0.0
  %893 = vmatpush1.msra.mxu0 %v830
  %894 = vmatprep.subr.mxu0 0.0
  %895 = vmatpush2.msra.mxu0 %v861
  %896 = vmatprep.subr.mxu0 0.0
  %897 = vmatpush2.msra.mxu0 %v860
  %898 = vmatprep.subr.mxu0 0.0
  %899 = vmatpush2.msra.mxu0 %v859
  %900 = vmatprep.subr.mxu0 0.0
  %901 = vmatpush2.msra.mxu0 %v858
  %902 = vmatprep.subr.mxu0 0.0
  %903 = vmatpush2.msra.mxu0 %v857
  %904 = vmatprep.subr.mxu0 0.0
  %905 = vmatpush2.msra.mxu0 %v856
  %906 = vmatprep.subr.mxu0 0.0
  %907 = vmatpush2.msra.mxu0 %v855
  %908 = vmatprep.subr.mxu0 0.0
  %909 = vmatpush2.msra.mxu0 %v854
  %910 = vmatprep.subr.mxu0 0.0
  %911 = vmatpush2.msra.mxu0 %v853
  %912 = vmatprep.subr.mxu0 0.0
  %913 = vmatpush2.msra.mxu0 %v852
  %914 = vmatprep.subr.mxu0 0.0
  %915 = vmatpush2.msra.mxu0 %v851
  %916 = vmatprep.subr.mxu0 0.0
  %917 = vmatpush2.msra.mxu0 %v850
  %918 = vmatprep.subr.mxu0 0.0
  %919 = vmatpush2.msra.mxu0 %v849
  %920 = vmatprep.subr.mxu0 0.0
  %921 = vmatpush2.msra.mxu0 %v848
  %922 = vmatprep.subr.mxu0 0.0
  %923 = vmatpush2.msra.mxu0 %v847
  %924 = vmatprep.subr.mxu0 0.0
  %925 = vmatpush2.msra.mxu0 %v846
  %926 = vmatprep.mubr.f32.mxu0 %v663
  %927 = vmatmul.mubr.f32.gmra.mxu0 %v662
  %v928 = vpop.f32.mrf.mxu0
  %v929 = vadd.f32 0.0, %v928
  %v930 = vpop.f32.mrf.mxu0
  %931 = vdwg.mxu0
  %v932 = vld [vmem:[%s6] sm:$0x3]
  %v934 = vlaneseq
  %v935 = vshrl.u32 %v934, 7
  %v936 = vsub.s32 0, %v935
  %v937 = vrot.slane %v932, %v936
  %v938 = vlaneseq
  %v939 = vshrl.u32 %v938, 7
  %v940 = vsub.s32 1, %v939
  %v941 = vrot.slane %v932, %v940
  %v944 = vmul.f32 %v662, %v937
  %v945 = vmul.f32 %v663, %v941
  %946 = vmatprep.subr.mxu0 0.0
  %947 = vmatpush1.msra.mxu0 %v845
  %948 = vmatprep.subr.mxu0 0.0
  %949 = vmatpush1.msra.mxu0 %v844
  %950 = vmatprep.subr.mxu0 0.0
  %951 = vmatpush1.msra.mxu0 %v843
  %952 = vmatprep.subr.mxu0 0.0
  %953 = vmatpush1.msra.mxu0 %v842
  %954 = vmatprep.subr.mxu0 0.0
  %955 = vmatpush1.msra.mxu0 %v841
  %956 = vmatprep.subr.mxu0 0.0
  %957 = vmatpush1.msra.mxu0 %v840
  %958 = vmatprep.subr.mxu0 0.0
  %959 = vmatpush1.msra.mxu0 %v839
  %960 = vmatprep.subr.mxu0 0.0
  %961 = vmatpush1.msra.mxu0 %v838
  %962 = vmatprep.subr.mxu0 0.0
  %963 = vmatpush1.msra.mxu0 %v837
  %964 = vmatprep.subr.mxu0 0.0
  %965 = vmatpush1.msra.mxu0 %v836
  %966 = vmatprep.subr.mxu0 0.0
  %967 = vmatpush1.msra.mxu0 %v835
  %968 = vmatprep.subr.mxu0 0.0
  %969 = vmatpush1.msra.mxu0 %v834
  %970 = vmatprep.subr.mxu0 0.0
  %971 = vmatpush1.msra.mxu0 %v833
  %972 = vmatprep.subr.mxu0 0.0
  %973 = vmatpush1.msra.mxu0 %v832
  %974 = vmatprep.subr.mxu0 0.0
  %975 = vmatpush1.msra.mxu0 %v831
  %976 = vmatprep.subr.mxu0 0.0
  %977 = vmatpush1.msra.mxu0 %v830
  %978 = vmatprep.subr.mxu0 0.0
  %979 = vmatpush2.msra.mxu0 %v861
  %980 = vmatprep.subr.mxu0 0.0
  %981 = vmatpush2.msra.mxu0 %v860
  %982 = vmatprep.subr.mxu0 0.0
  %983 = vmatpush2.msra.mxu0 %v859
  %984 = vmatprep.subr.mxu0 0.0
  %985 = vmatpush2.msra.mxu0 %v858
  %986 = vmatprep.subr.mxu0 0.0
  %987 = vmatpush2.msra.mxu0 %v857
  %988 = vmatprep.subr.mxu0 0.0
  %989 = vmatpush2.msra.mxu0 %v856
  %990 = vmatprep.subr.mxu0 0.0
  %991 = vmatpush2.msra.mxu0 %v855
  %992 = vmatprep.subr.mxu0 0.0
  %993 = vmatpush2.msra.mxu0 %v854
  %994 = vmatprep.subr.mxu0 0.0
  %995 = vmatpush2.msra.mxu0 %v853
  %996 = vmatprep.subr.mxu0 0.0
  %997 = vmatpush2.msra.mxu0 %v852
  %998 = vmatprep.subr.mxu0 0.0
  %999 = vmatpush2.msra.mxu0 %v851
  %1000 = vmatprep.subr.mxu0 0.0
  %1001 = vmatpush2.msra.mxu0 %v850
  %1002 = vmatprep.subr.mxu0 0.0
  %1003 = vmatpush2.msra.mxu0 %v849
  %1004 = vmatprep.subr.mxu0 0.0
  %1005 = vmatpush2.msra.mxu0 %v848
  %1006 = vmatprep.subr.mxu0 0.0
  %1007 = vmatpush2.msra.mxu0 %v847
  %1008 = vmatprep.subr.mxu0 0.0
  %1009 = vmatpush2.msra.mxu0 %v846
  %1010 = vmatprep.mubr.f32.mxu0 %v945
  %1011 = vmatmul.mubr.f32.gmra.mxu0 %v944
  %v1012 = vpop.f32.mrf.mxu0
  %v1013 = vadd.f32 0.0, %v1012
  %v1014 = vpop.f32.mrf.mxu0
  %1015 = vdwg.mxu0
  %v1016 = vrcp.pop %v929
  %v1017 = vmul.f32 %v1013, %v1016
  %vm1018 = vcmask 31744
  %1019 = vst.msk [vmem:[%s7] sm:$0xff] %vm1018, %v1017
  // Predicated region
  $region30: #{nec_forward.1} parent=0 // pred_check
    _
  $region31: #{nec_forward.1} parent=0 // pred_check_branch
    %1021 = sbr.rel (0) target = $region33
  $region32: #{nec_forward.1} parent=0 // pred_region
    _
  $region33: #{nec_forward.1} parent=0 // pred_fallthru
    _
  // Predicated region
  $region34: #{nec_forward.1} parent=0 // pred_check
    _
  $region35: #{nec_forward.1} parent=0 // pred_check_branch
    %1023 = sbr.rel (0) target = $region37
  $region36: #{nec_forward.1} parent=0 // pred_region
    _
  $region37: #{nec_forward.1} parent=0 // pred_fallthru
    _

</llo_original>
